<compile_context>
chip_gen: v5e
topology: v5e:2x2
jax: 0.10.0
libtpu: 0.0.40
codegen_flags: <defaults>
</compile_context>

<pallas_src>
import functools

import jax
import jax.numpy as jnp
import numpy as np
from jax import lax
from jax.experimental import pallas as pl
from jax.experimental.pallas import tpu as pltpu


def _round_up(x, m):
    return (x + m - 1) // m * m


def _dot(a, b):
    # Default MXU precision, f32 accumulation.
    return jnp.dot(a, b, preferred_element_type=jnp.float32)


def _sigmoid(x):
    return 1.0 / (1.0 + jnp.exp(-x))


def dlem_kernel(xcol_ref, cd_ref, w1_ref, b1_ref, w2_ref, b2_ref, wt_ref, b3_ref,
                w4_ref, b4_ref, const_ref, out_ref, *, index_diag, transform, batch):
    """Whole DLEM.forward (all batches) in one invocation.

    xcol_ref : (L1, B*Kp)       im2col of the signal; batch-blocked along lanes
    cd_ref   : (dl, B)          curr_diag transposed (length on sublanes, batch on lanes)
    w1_ref   : (B*Kp, B*Hp)     Conv1d(k=3) as a block-diagonal matmul weight
    w2_ref   : (B*Hp, B*Hp)     Conv1d(k=1)
    wt_ref   : (3, B*Hp, B*Hp)  ConvTranspose1d(k=3), one block-diag weight per tap
    w4_ref   : (B*Hp, 2*B)      Conv1d(k=1); columns = [left(b=0..B-1), right(b=0..B-1)]
    const_ref: (1,)   SMEM      self.const
    out_ref  : (dl-1, B)
    """
    L1 = xcol_ref.shape[0]
    L = L1 + 2                      # ConvTranspose output length == n
    dl = cd_ref.shape[0]
    B = batch
    n = L
    d = index_diag
    W = w2_ref.shape[0]             # B * Hp (hidden lane width)

    # Conv1d(Cin->10, k=3, valid) + ReLU : one matmul over the im2col slab.
    x = xcol_ref[...]                                               # (L1, B*Kp)
    h1 = jnp.maximum(_dot(x, w1_ref[...]) + b1_ref[...], 0.0)       # (L1, W)

    # Conv1d(10->10, k=1) + ReLU
    h2 = jnp.maximum(_dot(h1, w2_ref[...]) + b2_ref[...], 0.0)      # (L1, W)

    # ConvTranspose1d(10->10, k=3): h3[u] = sum_k h2[u-k] @ Wt_k  (zero outside [0, L1)).
    # Shift/zero-extension via exact 0/1 selector matrices on the MXU (values exactly
    # representable, default precision adds no rounding).  Stays in registers.
    row = lax.broadcasted_iota(jnp.int32, (L, L1), 0)
    col = lax.broadcasted_iota(jnp.int32, (L, L1), 1)
    diff = row - col
    h3 = jnp.zeros((L, W), jnp.float32)
    for k in range(3):                                              # static 3-tap unroll
        sel_k = jnp.where(diff == k, 1.0, 0.0)                      # (L, L1) shift-by-k
        h3 = h3 + _dot(sel_k, _dot(h2, wt_ref[k]))
    h3 = jnp.maximum(h3 + b3_ref[...], 0.0)                         # (L, W)

    # Conv1d(10->2, k=1) + Sigmoid.  Column blocks give left / right for every batch.
    lr = _sigmoid(_dot(h3, w4_ref[...]) + b4_ref[...])              # (L, 2B)
    left = lr[:, 0:B]                                               # (L, B)
    right = lr[:, B:2 * B]                                          # (L, B)

    # DLEM diagonal propagation for all batches at once (length on sublanes).
    cd = cd_ref[...]                                                # (dl, B)
    mass_in = cd[1:dl, :] * right[1:n - d, :] + cd[0:dl - 1, :] * left[d:n - 1, :]
    mass_out = right[0:n - d - 1, :] + left[d + 1:n, :]
    inv = pl.reciprocal(mass_out, approx=True)                      # EUP seed
    inv = inv * (2.0 - mass_out * inv)                              # 1 Newton step (VPU)
    nxt = const_ref[0] * mass_in * inv                              # (dl-1, B)

    if transform:
        nxt = jnp.log(nxt)
        nxt = nxt - jnp.mean(nxt)       # global mean over batch x positions (in registers)

    out_ref[...] = nxt                  # single full-block store


def dlem_forward(signal, curr_diag, params, index_diag, transform=True):
    """signal: (B, Cin, L) NCL; curr_diag: (B, L - index_diag). Returns (B, L - index_diag - 1)."""
    B, Cin, L = signal.shape
    dl = curr_diag.shape[1]
    if dl != L - index_diag:
        raise ValueError(f"curr_diag length {dl} must equal n - index_diag = {L - index_diag}")
    c1w, c1b, c2w, c2b, ctw, ctb, c4w, c4b, const = params
    f32 = jnp.float32
    L1 = L - 2
    hid = c1w.shape[0]                          # 10
    Kraw = 3 * Cin
    Kp = _round_up(Kraw, 8)                     # sublane/lane friendly padding
    Hp = _round_up(hid, 8)

    # ---------- host-side layout plumbing (im2col, weight re-layout, zero padding) ----------
    sig_cl = jnp.transpose(signal, (0, 2, 1)).astype(f32)                       # (B, L, Cin)
    xcol = jnp.concatenate(
        [sig_cl[:, 0:L1, :], sig_cl[:, 1:L1 + 1, :], sig_cl[:, 2:L1 + 2, :]], axis=2)  # (B, L1, 3Cin)
    xcol = jnp.pad(xcol, ((0, 0), (0, 0), (0, Kp - Kraw)))
    xcol = jnp.transpose(xcol, (1, 0, 2)).reshape(L1, B * Kp)                   # (L1, B*Kp)

    eye_b = jnp.eye(B, dtype=f32)

    def pad2(w, rows, cols):
        w = w.astype(f32)
        return jnp.pad(w, ((0, rows - w.shape[0]), (0, cols - w.shape[1])))

    def bias_blk(b):
        return jnp.tile(jnp.pad(b.astype(f32), (0, Hp - b.shape[0])).reshape(1, Hp), (1, B))

    # Conv1d(Cin->10, k=3): (3*Cin, 10) tap-major rows, block-diag over batch.
    w1 = jnp.transpose(c1w, (2, 1, 0)).reshape(Kraw, hid)
    w1b = jnp.kron(eye_b, pad2(w1, Kp, Hp))                                     # (B*Kp, B*Hp)
    b1b = bias_blk(c1b)
    # Conv1d(10->10, k=1)
    w2b = jnp.kron(eye_b, pad2(jnp.transpose(c2w[:, :, 0]), Hp, Hp))            # (B*Hp, B*Hp)
    b2b = bias_blk(c2b)
    # ConvTranspose1d(10->10, k=3): per-tap (in, out) weight, block-diag over batch.
    wtb = jnp.stack([jnp.kron(eye_b, pad2(ctw[:, :, k], Hp, Hp)) for k in range(3)], axis=0)
    b3b = bias_blk(ctb)
    # Conv1d(10->2, k=1): output columns ordered [left(b=0..B-1), right(b=0..B-1)].
    w4 = jnp.transpose(c4w[:, :, 0]).astype(f32)                                # (10, 2)
    w4p = jnp.pad(w4, ((0, Hp - hid), (0, 0)))                                  # (Hp, 2)
    w4b = jnp.concatenate([jnp.kron(eye_b, w4p[:, 0:1]), jnp.kron(eye_b, w4p[:, 1:2])], axis=1)
    b4b = jnp.repeat(c4b.astype(f32), B).reshape(1, 2 * B)

    cdT = jnp.transpose(curr_diag).astype(f32)                                  # (dl, B)
    const_arr = jnp.asarray(const, f32).reshape(1)

    vmem = pl.BlockSpec(memory_space=pltpu.MemorySpace.VMEM)
    smem = pl.BlockSpec(memory_space=pltpu.MemorySpace.SMEM)
    kernel = functools.partial(dlem_kernel, index_diag=index_diag,
                               transform=transform, batch=B)

    # Single invocation: all batches, all converter layers, the propagation and the
    # centering fused into one pallas_call (launch/DMA overhead dominates at these sizes).
    outT = pl.pallas_call(
        kernel,
        out_shape=jax.ShapeDtypeStruct((dl - 1, B), jnp.float32),
        in_specs=[vmem] * 10 + [smem],
        out_specs=vmem,
    )(xcol, cdT, w1b, b1b, w2b, b2b, wtb, b3b, w4b, b4b, const_arr)
    return jnp.transpose(outT)                                                  # (B, dl-1)


# ---------------- pure-JAX reference (PyTorch semantics, default matmul precision) ----------------

def _converter_ref(signal, params):
    c1w, c1b, c2w, c2b, ctw, ctb, c4w, c4b, _ = params
    x = signal.astype(jnp.float32)                                  # (B, Cin, L)
    B, _, L = x.shape
    L1 = L - 2
    hid = c1w.shape[0]
    # Conv1d(k=3, valid): h[b,o,t] = sum_{c,k} w1[o,c,k] x[b,c,t+k]
    taps = jnp.stack([x[:, :, k:k + L1] for k in range(3)], axis=-1)            # (B, Cin, L1, 3)
    h = jnp.einsum('bclk,ock->bol', taps, c1w) + c1b[None, :, None]
    h = jnp.maximum(h, 0.0)
    # Conv1d(k=1)
    h = jnp.einsum('bcl,oc->bol', h, c2w[:, :, 0]) + c2b[None, :, None]
    h = jnp.maximum(h, 0.0)
    # ConvTranspose1d(k=3): out[b,o,u] = sum_{c,k} wt[c,o,k] h[b,c,u-k]
    y = jnp.einsum('bcl,cok->bolk', h, ctw)                                     # (B, hid, L1, 3)
    out = jnp.zeros((B, hid, L), jnp.float32)
    for k in range(3):
        out = out.at[:, :, k:k + L1].add(y[:, :, :, k])
    out = jnp.maximum(out + ctb[None, :, None], 0.0)
    # Conv1d(k=1) -> 2 channels + Sigmoid
    z = jnp.einsum('bcl,oc->bol', out, c4w[:, :, 0]) + c4b[None, :, None]
    lr = 1.0 / (1.0 + jnp.exp(-z))
    return lr[:, 0, :], lr[:, 1, :]


def dlem_forward_ref(signal, curr_diag, params, index_diag, transform=True):
    const = params[-1]
    n = signal.shape[2]
    d = index_diag
    dl = curr_diag.shape[1]
    left, right = _converter_ref(signal, params)
    mass_in = (curr_diag[:, 1:dl] * right[:, 1:n - d] +
               curr_diag[:, 0:dl - 1] * left[:, d:n - 1])
    mass_out = right[:, 0:n - d - 1] + left[:, d + 1:n]
    nxt = const * mass_in / mass_out
    if transform:
        nxt = jnp.log(nxt)
        nxt = nxt - jnp.mean(nxt)
    return nxt


if __name__ == "__main__":
    B, Cin, n = 2, 4, 16          # batch, dim_num, n (sequence length)
    index_diag = 3                # current diagonal index
    key = jax.random.PRNGKey(0)
    ks = jax.random.split(key, 10)

    signal = jax.random.normal(ks[0], (B, Cin, n), jnp.float32)
    curr_diag = jax.random.uniform(ks[1], (B, n - index_diag), jnp.float32, 0.5, 1.5)

    def init(k, shape, scale=0.3):
        return scale * jax.random.normal(k, shape, jnp.float32)

    # Deterministic synthetic parameters (PyTorch layer shapes).
    params = (
        init(ks[2], (10, Cin, 3)), init(ks[3], (10,), 0.1),   # Conv1d(dim_num, 10, 3)
        init(ks[4], (10, 10, 1)),  init(ks[5], (10,), 0.1),   # Conv1d(10, 10, 1)
        init(ks[6], (10, 10, 3)),  init(ks[7], (10,), 0.1),   # ConvTranspose1d(10, 10, 3)
        init(ks[8], (2, 10, 1)),   init(ks[9], (2,), 0.1),    # Conv1d(10, 2, 1)
        jnp.float32(0.99),                                    # self.const
    )

    out = jax.block_until_ready(dlem_forward(signal, curr_diag, params, index_diag, True))
    ref = jax.block_until_ready(dlem_forward_ref(signal, curr_diag, params, index_diag, True))
    assert out.shape == (B, n - index_diag - 1)
    np.testing.assert_allclose(np.asarray(out), np.asarray(ref), rtol=1e-3, atol=1e-3)

    out_nt = jax.block_until_ready(dlem_forward(signal, curr_diag, params, index_diag, False))
    ref_nt = jax.block_until_ready(dlem_forward_ref(signal, curr_diag, params, index_diag, False))
    np.testing.assert_allclose(np.asarray(out_nt), np.asarray(ref_nt), rtol=1e-3, atol=1e-3)

    print("KERNEL_OK")
</pallas_src>

<mosaic_0001>
module attributes {stable_mosaic.version = 11 : i64} {
  func.func @dlem_kernel(%arg0: memref<14x32xf32, #tpu.memory_space<vmem>>, %arg1: memref<13x2xf32, #tpu.memory_space<vmem>>, %arg2: memref<32x32xf32, #tpu.memory_space<vmem>>, %arg3: memref<1x32xf32, #tpu.memory_space<vmem>>, %arg4: memref<32x32xf32, #tpu.memory_space<vmem>>, %arg5: memref<1x32xf32, #tpu.memory_space<vmem>>, %arg6: memref<3x32x32xf32, #tpu.memory_space<vmem>>, %arg7: memref<1x32xf32, #tpu.memory_space<vmem>>, %arg8: memref<32x4xf32, #tpu.memory_space<vmem>>, %arg9: memref<1x4xf32, #tpu.memory_space<vmem>>, %arg10: memref<1xf32, #tpu.memory_space<smem>>, %arg11: memref<12x2xf32, #tpu.memory_space<vmem>>) attributes {dimension_semantics = [], scalar_prefetch = 0 : i64, scratch_operands = 0 : i64, tpu.core_type = #tpu.core_type<tc>} {
    %c0 = arith.constant 0 : index
    %c0_0 = arith.constant 0 : index
    %0 = vector.load %arg0[%c0, %c0_0] : memref<14x32xf32, #tpu.memory_space<vmem>>, vector<14x32xf32>
    %c0_1 = arith.constant 0 : index
    %c0_2 = arith.constant 0 : index
    %1 = vector.load %arg2[%c0_1, %c0_2] : memref<32x32xf32, #tpu.memory_space<vmem>>, vector<32x32xf32>
    %cst = arith.constant dense<0.000000e+00> : vector<14x32xf32>
    %2 = tpu.matmul %0, %1, %cst {dimension_numbers = #tpu.dot_dimension_numbers<[1], [0], [0], [1], [0, 0, 1, 1], [], []>} : vector<14x32xf32>, vector<32x32xf32>, vector<14x32xf32> -> vector<14x32xf32>
    %c0_3 = arith.constant 0 : index
    %c0_4 = arith.constant 0 : index
    %3 = vector.load %arg3[%c0_3, %c0_4] : memref<1x32xf32, #tpu.memory_space<vmem>>, vector<1x32xf32>
    %4 = vector.broadcast %3 : vector<1x32xf32> to vector<14x32xf32>
    %5 = arith.addf %2, %4 : vector<14x32xf32>
    %cst_5 = arith.constant 0.000000e+00 : f32
    %6 = vector.broadcast %cst_5 : f32 to vector<14x32xf32>
    %7 = arith.maximumf %5, %6 : vector<14x32xf32>
    %c0_6 = arith.constant 0 : index
    %c0_7 = arith.constant 0 : index
    %8 = vector.load %arg4[%c0_6, %c0_7] : memref<32x32xf32, #tpu.memory_space<vmem>>, vector<32x32xf32>
    %cst_8 = arith.constant dense<0.000000e+00> : vector<14x32xf32>
    %9 = tpu.matmul %7, %8, %cst_8 {dimension_numbers = #tpu.dot_dimension_numbers<[1], [0], [0], [1], [0, 0, 1, 1], [], []>} : vector<14x32xf32>, vector<32x32xf32>, vector<14x32xf32> -> vector<14x32xf32>
    %c0_9 = arith.constant 0 : index
    %c0_10 = arith.constant 0 : index
    %10 = vector.load %arg5[%c0_9, %c0_10] : memref<1x32xf32, #tpu.memory_space<vmem>>, vector<1x32xf32>
    %11 = vector.broadcast %10 : vector<1x32xf32> to vector<14x32xf32>
    %12 = arith.addf %9, %11 : vector<14x32xf32>
    %cst_11 = arith.constant 0.000000e+00 : f32
    %13 = vector.broadcast %cst_11 : f32 to vector<14x32xf32>
    %14 = arith.maximumf %12, %13 : vector<14x32xf32>
    %15 = tpu.iota {dimensions = array<i32: 0>} : vector<16x14xi32>
    %16 = tpu.iota {dimensions = array<i32: 1>} : vector<16x14xi32>
    %17 = arith.subi %15, %16 : vector<16x14xi32>
    %cst_12 = arith.constant 0.000000e+00 : f32
    %18 = vector.broadcast %cst_12 : f32 to vector<16x32xf32>
    %c0_i32 = arith.constant 0 : i32
    %19 = vector.broadcast %c0_i32 : i32 to vector<16x14xi32>
    %20 = arith.cmpi eq, %17, %19 : vector<16x14xi32>
    %cst_13 = arith.constant 1.000000e+00 : f32
    %cst_14 = arith.constant 0.000000e+00 : f32
    %21 = vector.broadcast %cst_13 : f32 to vector<16x14xf32>
    %22 = vector.broadcast %cst_14 : f32 to vector<16x14xf32>
    %23 = arith.select %20, %21, %22 : vector<16x14xi1>, vector<16x14xf32>
    %c0_15 = arith.constant 0 : index
    %c0_16 = arith.constant 0 : index
    %c0_17 = arith.constant 0 : index
    %24 = vector.load %arg6[%c0_15, %c0_16, %c0_17] : memref<3x32x32xf32, #tpu.memory_space<vmem>>, vector<1x32x32xf32>
    %25 = vector.shape_cast %24 : vector<1x32x32xf32> to vector<32x32xf32>
    %cst_18 = arith.constant dense<0.000000e+00> : vector<14x32xf32>
    %26 = tpu.matmul %14, %25, %cst_18 {dimension_numbers = #tpu.dot_dimension_numbers<[1], [0], [0], [1], [0, 0, 1, 1], [], []>} : vector<14x32xf32>, vector<32x32xf32>, vector<14x32xf32> -> vector<14x32xf32>
    %cst_19 = arith.constant dense<0.000000e+00> : vector<16x32xf32>
    %27 = tpu.matmul %23, %26, %cst_19 {dimension_numbers = #tpu.dot_dimension_numbers<[1], [0], [0], [1], [0, 0, 1, 1], [], []>} : vector<16x14xf32>, vector<14x32xf32>, vector<16x32xf32> -> vector<16x32xf32>
    %28 = arith.addf %18, %27 : vector<16x32xf32>
    %c1_i32 = arith.constant 1 : i32
    %29 = vector.broadcast %c1_i32 : i32 to vector<16x14xi32>
    %30 = arith.cmpi eq, %17, %29 : vector<16x14xi32>
    %cst_20 = arith.constant 1.000000e+00 : f32
    %cst_21 = arith.constant 0.000000e+00 : f32
    %31 = vector.broadcast %cst_20 : f32 to vector<16x14xf32>
    %32 = vector.broadcast %cst_21 : f32 to vector<16x14xf32>
    %33 = arith.select %30, %31, %32 : vector<16x14xi1>, vector<16x14xf32>
    %c1 = arith.constant 1 : index
    %c0_22 = arith.constant 0 : index
    %c0_23 = arith.constant 0 : index
    %34 = vector.load %arg6[%c1, %c0_22, %c0_23] : memref<3x32x32xf32, #tpu.memory_space<vmem>>, vector<1x32x32xf32>
    %35 = vector.shape_cast %34 : vector<1x32x32xf32> to vector<32x32xf32>
    %cst_24 = arith.constant dense<0.000000e+00> : vector<14x32xf32>
    %36 = tpu.matmul %14, %35, %cst_24 {dimension_numbers = #tpu.dot_dimension_numbers<[1], [0], [0], [1], [0, 0, 1, 1], [], []>} : vector<14x32xf32>, vector<32x32xf32>, vector<14x32xf32> -> vector<14x32xf32>
    %cst_25 = arith.constant dense<0.000000e+00> : vector<16x32xf32>
    %37 = tpu.matmul %33, %36, %cst_25 {dimension_numbers = #tpu.dot_dimension_numbers<[1], [0], [0], [1], [0, 0, 1, 1], [], []>} : vector<16x14xf32>, vector<14x32xf32>, vector<16x32xf32> -> vector<16x32xf32>
    %38 = arith.addf %28, %37 : vector<16x32xf32>
    %c2_i32 = arith.constant 2 : i32
    %39 = vector.broadcast %c2_i32 : i32 to vector<16x14xi32>
    %40 = arith.cmpi eq, %17, %39 : vector<16x14xi32>
    %cst_26 = arith.constant 1.000000e+00 : f32
    %cst_27 = arith.constant 0.000000e+00 : f32
    %41 = vector.broadcast %cst_26 : f32 to vector<16x14xf32>
    %42 = vector.broadcast %cst_27 : f32 to vector<16x14xf32>
    %43 = arith.select %40, %41, %42 : vector<16x14xi1>, vector<16x14xf32>
    %c2 = arith.constant 2 : index
    %c0_28 = arith.constant 0 : index
    %c0_29 = arith.constant 0 : index
    %44 = vector.load %arg6[%c2, %c0_28, %c0_29] : memref<3x32x32xf32, #tpu.memory_space<vmem>>, vector<1x32x32xf32>
    %45 = vector.shape_cast %44 : vector<1x32x32xf32> to vector<32x32xf32>
    %cst_30 = arith.constant dense<0.000000e+00> : vector<14x32xf32>
    %46 = tpu.matmul %14, %45, %cst_30 {dimension_numbers = #tpu.dot_dimension_numbers<[1], [0], [0], [1], [0, 0, 1, 1], [], []>} : vector<14x32xf32>, vector<32x32xf32>, vector<14x32xf32> -> vector<14x32xf32>
    %cst_31 = arith.constant dense<0.000000e+00> : vector<16x32xf32>
    %47 = tpu.matmul %43, %46, %cst_31 {dimension_numbers = #tpu.dot_dimension_numbers<[1], [0], [0], [1], [0, 0, 1, 1], [], []>} : vector<16x14xf32>, vector<14x32xf32>, vector<16x32xf32> -> vector<16x32xf32>
    %48 = arith.addf %38, %47 : vector<16x32xf32>
    %c0_32 = arith.constant 0 : index
    %c0_33 = arith.constant 0 : index
    %49 = vector.load %arg7[%c0_32, %c0_33] : memref<1x32xf32, #tpu.memory_space<vmem>>, vector<1x32xf32>
    %50 = vector.broadcast %49 : vector<1x32xf32> to vector<16x32xf32>
    %51 = arith.addf %48, %50 : vector<16x32xf32>
    %cst_34 = arith.constant 0.000000e+00 : f32
    %52 = vector.broadcast %cst_34 : f32 to vector<16x32xf32>
    %53 = arith.maximumf %51, %52 : vector<16x32xf32>
    %c0_35 = arith.constant 0 : index
    %c0_36 = arith.constant 0 : index
    %54 = vector.load %arg8[%c0_35, %c0_36] : memref<32x4xf32, #tpu.memory_space<vmem>>, vector<32x4xf32>
    %cst_37 = arith.constant dense<0.000000e+00> : vector<16x4xf32>
    %55 = tpu.matmul %53, %54, %cst_37 {dimension_numbers = #tpu.dot_dimension_numbers<[1], [0], [0], [1], [0, 0, 1, 1], [], []>} : vector<16x32xf32>, vector<32x4xf32>, vector<16x4xf32> -> vector<16x4xf32>
    %c0_38 = arith.constant 0 : index
    %c0_39 = arith.constant 0 : index
    %56 = vector.load %arg9[%c0_38, %c0_39] : memref<1x4xf32, #tpu.memory_space<vmem>>, vector<1x4xf32>
    %57 = vector.broadcast %56 : vector<1x4xf32> to vector<16x4xf32>
    %58 = arith.addf %55, %57 : vector<16x4xf32>
    %cst_40 = arith.constant 0.000000e+00 : f32
    %59 = vector.broadcast %cst_40 : f32 to vector<16x4xf32>
    %60 = arith.subf %59, %58 : vector<16x4xf32>
    %61 = math.exp %60 : vector<16x4xf32>
    %cst_41 = arith.constant 1.000000e+00 : f32
    %62 = vector.broadcast %cst_41 : f32 to vector<16x4xf32>
    %63 = arith.addf %62, %61 : vector<16x4xf32>
    %cst_42 = arith.constant 1.000000e+00 : f32
    %64 = vector.broadcast %cst_42 : f32 to vector<16x4xf32>
    %65 = arith.divf %64, %63 : vector<16x4xf32>
    %66 = vector.extract_strided_slice %65 {offsets = [0, 0], sizes = [16, 2], strides = [1, 1]} : vector<16x4xf32> to vector<16x2xf32>
    %67 = vector.extract_strided_slice %65 {offsets = [0, 2], sizes = [16, 2], strides = [1, 1]} : vector<16x4xf32> to vector<16x2xf32>
    %c0_43 = arith.constant 0 : index
    %c0_44 = arith.constant 0 : index
    %68 = vector.load %arg1[%c0_43, %c0_44] : memref<13x2xf32, #tpu.memory_space<vmem>>, vector<13x2xf32>
    %69 = vector.extract_strided_slice %68 {offsets = [1, 0], sizes = [12, 2], strides = [1, 1]} : vector<13x2xf32> to vector<12x2xf32>
    %70 = vector.extract_strided_slice %67 {offsets = [1, 0], sizes = [12, 2], strides = [1, 1]} : vector<16x2xf32> to vector<12x2xf32>
    %71 = arith.mulf %69, %70 : vector<12x2xf32>
    %72 = vector.extract_strided_slice %68 {offsets = [0, 0], sizes = [12, 2], strides = [1, 1]} : vector<13x2xf32> to vector<12x2xf32>
    %73 = vector.extract_strided_slice %66 {offsets = [3, 0], sizes = [12, 2], strides = [1, 1]} : vector<16x2xf32> to vector<12x2xf32>
    %74 = arith.mulf %72, %73 : vector<12x2xf32>
    %75 = arith.addf %71, %74 : vector<12x2xf32>
    %76 = vector.extract_strided_slice %67 {offsets = [0, 0], sizes = [12, 2], strides = [1, 1]} : vector<16x2xf32> to vector<12x2xf32>
    %77 = vector.extract_strided_slice %66 {offsets = [4, 0], sizes = [12, 2], strides = [1, 1]} : vector<16x2xf32> to vector<12x2xf32>
    %78 = arith.addf %76, %77 : vector<12x2xf32>
    %79 = tpu.reciprocal %78 {approx = true} : vector<12x2xf32> -> vector<12x2xf32>
    %80 = arith.mulf %78, %79 : vector<12x2xf32>
    %cst_45 = arith.constant 2.000000e+00 : f32
    %81 = vector.broadcast %cst_45 : f32 to vector<12x2xf32>
    %82 = arith.subf %81, %80 : vector<12x2xf32>
    %83 = arith.mulf %79, %82 : vector<12x2xf32>
    %c0_46 = arith.constant 0 : index
    %84 = memref.load %arg10[%c0_46] : memref<1xf32, #tpu.memory_space<smem>>
    %85 = vector.broadcast %84 : f32 to vector<12x2xf32>
    %86 = arith.mulf %85, %75 : vector<12x2xf32>
    %87 = arith.mulf %86, %83 : vector<12x2xf32>
    %88 = math.log %87 : vector<12x2xf32>
    %89 = vector.shape_cast %88 : vector<12x2xf32> to vector<1x12x2xf32>
    %cst_47 = arith.constant dense<0.000000e+00> : vector<1xf32>
    %90 = vector.multi_reduction <add>, %89, %cst_47 [1, 2] : vector<1x12x2xf32> to vector<1xf32>
    %91 = vector.shape_cast %90 : vector<1xf32> to vector<1x1x1xf32>
    %92 = vector.extract %91[0, 0, 0] : f32 from vector<1x1x1xf32>
    %cst_48 = arith.constant 2.400000e+01 : f32
    %93 = arith.divf %92, %cst_48 : f32
    %94 = vector.broadcast %93 : f32 to vector<12x2xf32>
    %95 = arith.subf %88, %94 : vector<12x2xf32>
    %c0_49 = arith.constant 0 : index
    %c0_50 = arith.constant 0 : index
    %96 = vector.load %arg11[%c0_49, %c0_50] : memref<12x2xf32, #tpu.memory_space<vmem>>, vector<12x2xf32>
    tpu.vector_store %arg11[%c0_49, %c0_50], %95 {strides = array<i32>} : memref<12x2xf32, #tpu.memory_space<vmem>>, vector<12x2xf32>,
    return
  }
}

</mosaic_0001>

<llo_original>
// kernel: tpu_custom_call.1
$region0: #{tpu_custom_call.1}
  #allocation0 [shape = 'u32[]', space=smem, size = 0x4, offset = 0x4, fixed_abs, tag = 'smem constant byte address 0x4 - core index']
  #allocation1 [shape = 'u32[72,128]{1,0:T(1,128)}', space=vmem, size = 0x9000, scoped, tag = 'internal scratch']
  #allocation2 [shape = 'f32[1]{0:T(128)S(6)}', space=smem, size = 0x200, scoped, tag = 'scoped memory for tpu_custom_call.1']
  %s0 = inlined_call_operand.vmem [shape: f32[14,32], index: 0, kind: input, shape index: {}]
  %s1 = inlined_call_operand.vmem [shape: f32[13,2], index: 1, kind: input, shape index: {}]
  %s2 = inlined_call_operand.vmem [shape: f32[32,32], index: 2, kind: input, shape index: {}]
  %s3 = inlined_call_operand.vmem [shape: f32[1,32], index: 3, kind: input, shape index: {}]
  %s4 = inlined_call_operand.hbm [shape: f32[32,32], index: 4, kind: input, shape index: {}]
  %s5 = inlined_call_operand.vmem [shape: f32[1,32], index: 5, kind: input, shape index: {}]
  %s6 = inlined_call_operand.hbm [shape: f32[3,32,32], index: 6, kind: input, shape index: {}]
  %s7 = inlined_call_operand.vmem [shape: f32[1,32], index: 7, kind: input, shape index: {}]
  %s8 = inlined_call_operand.vmem [shape: f32[32,4], index: 8, kind: input, shape index: {}]
  %s9 = inlined_call_operand.vmem [shape: f32[1,4], index: 9, kind: input, shape index: {}]
  %s10 = inlined_call_operand.<no memory space> [shape: f32[1], index: 10, kind: input, shape index: {}]
  %s11 = inlined_call_operand.vmem [shape: f32[12,2], index: 11, kind: output, shape index: {}]
  %s12 = sld [smem:[#allocation0]]
  $region62: #{tpu_custom_call.1} parent=0
    _
  %s14 = ssub.s32 1, %s12
  %s15 = scalar_select 0, %s14, %s12
  %16 = sst [smem:[#allocation2]] %s10
  $region1: #{tpu_custom_call.1} parent=0
    #allocation3 [shape = 'u8[16384]{0}', space=vmem, size = 0x4000, scoped, tag = 'input window, operand 4, single buffered']
    #allocation4 [shape = 's32[1]{0}', space=sflag, size = 0x4, scoped, tag = 'scoped memory for tpu_custom_call.1']
    #allocation5 [shape = 'u8[49152]{0}', space=vmem, size = 0xc000, scoped, tag = 'input window, operand 6, single buffered']
    #allocation6 [shape = 's32[1]{0}', space=sflag, size = 0x4, scoped, tag = 'scoped memory for tpu_custom_call.1']
    %17 = vsyncpa [#allocation4], 0
    %18 = vsyncpa [#allocation6], 0
    // Predicated region
    $region2: #{tpu_custom_call.1} parent=1 // pred_check
      _
    $region3: #{tpu_custom_call.1} parent=1 // pred_check_branch
      %20 = sbr.rel (0) target = $region5
    $region4: #{tpu_custom_call.1} parent=1 // pred_region
      _
    $region5: #{tpu_custom_call.1} parent=1 // pred_fallthru
      _
    // Predicated region
    $region6: #{tpu_custom_call.1} parent=1 // pred_check
      _
    $region7: #{tpu_custom_call.1} parent=1 // pred_check_branch
      %22 = sbr.rel (0) target = $region9
    $region8: #{tpu_custom_call.1} parent=1 // pred_region
      _
    $region9: #{tpu_custom_call.1} parent=1 // pred_fallthru
      _
    // Predicated region
    $region10: #{tpu_custom_call.1} parent=1 // pred_check
      _
    $region11: #{tpu_custom_call.1} parent=1 // pred_check_branch
      %24 = sbr.rel (0) target = $region13
    $region12: #{tpu_custom_call.1} parent=1 // pred_region
      _
    $region13: #{tpu_custom_call.1} parent=1 // pred_fallthru
      _
    // Predicated region
    $region14: #{tpu_custom_call.1} parent=1 // pred_check
      _
    $region15: #{tpu_custom_call.1} parent=1 // pred_check_branch
      %26 = sbr.rel (0) target = $region17
    $region16: #{tpu_custom_call.1} parent=1 // pred_region
      _
    $region17: #{tpu_custom_call.1} parent=1 // pred_fallthru
      _
    // Predicated region
    $region18: #{tpu_custom_call.1} parent=1 // pred_check
      _
    $region19: #{tpu_custom_call.1} parent=1 // pred_check_branch
      %28 = sbr.rel (0) target = $region21
    $region20: #{tpu_custom_call.1} parent=1 // pred_region
      %30 = vsyncadd [#allocation4], 0
      %s31 = sshll.u32 %s4, 4
      %s32 = int_to_ptr.hbm [resolvable:$true] %s31
      %s33 = sshll.u32 [#allocation3], 4
      %s34 = int_to_ptr.vmem [resolvable:$true] %s33
      %39 = dma.hbm_to_vmem [thread:$0]  %s32, 512, %s34, [#allocation4], 128, 128, 8
    $region21: #{tpu_custom_call.1} parent=1 // pred_fallthru
      _
    // Predicated region
    $region22: #{tpu_custom_call.1} parent=1 // pred_check
      _
    $region23: #{tpu_custom_call.1} parent=1 // pred_check_branch
      %41 = sbr.rel (0) target = $region25
    $region24: #{tpu_custom_call.1} parent=1 // pred_region
      _
    $region25: #{tpu_custom_call.1} parent=1 // pred_fallthru
      _
    // Predicated region
    $region26: #{tpu_custom_call.1} parent=1 // pred_check
      _
    $region27: #{tpu_custom_call.1} parent=1 // pred_check_branch
      %43 = sbr.rel (0) target = $region29
    $region28: #{tpu_custom_call.1} parent=1 // pred_region
      %45 = vsyncadd [#allocation6], 0
      %s46 = sshll.u32 %s6, 4
      %s47 = int_to_ptr.hbm [resolvable:$true] %s46
      %s48 = sshll.u32 [#allocation5], 4
      %s49 = int_to_ptr.vmem [resolvable:$true] %s48
      %54 = dma.hbm_to_vmem [thread:$0]  %s47, 1536, %s49, [#allocation6], 128, 128, 8
    $region29: #{tpu_custom_call.1} parent=1 // pred_fallthru
      _
    // Predicated region
    $region30: #{tpu_custom_call.1} parent=1 // pred_check
      _
    $region31: #{tpu_custom_call.1} parent=1 // pred_check_branch
      %56 = sbr.rel (0) target = $region33
    $region32: #{tpu_custom_call.1} parent=1 // pred_region
      _
    $region33: #{tpu_custom_call.1} parent=1 // pred_fallthru
      _
    // Predicated region
    $region34: #{tpu_custom_call.1} parent=1 // pred_check
      _
    $region35: #{tpu_custom_call.1} parent=1 // pred_check_branch
      %58 = sbr.rel (0) target = $region37
    $region36: #{tpu_custom_call.1} parent=1 // pred_region
      _
    $region37: #{tpu_custom_call.1} parent=1 // pred_fallthru
      _
    // Predicated region
    $region38: #{tpu_custom_call.1} parent=1 // pred_check
      _
    $region39: #{tpu_custom_call.1} parent=1 // pred_check_branch
      %60 = sbr.rel (0) target = $region41
    $region40: #{tpu_custom_call.1} parent=1 // pred_region
      _
    $region41: #{tpu_custom_call.1} parent=1 // pred_fallthru
      _
    // Predicated region
    $region42: #{tpu_custom_call.1} parent=1 // pred_check
      _
    $region43: #{tpu_custom_call.1} parent=1 // pred_check_branch
      %62 = sbr.rel (0) target = $region45
    $region44: #{tpu_custom_call.1} parent=1 // pred_region
      _
    $region45: #{tpu_custom_call.1} parent=1 // pred_fallthru
      _
    // Predicated region
    $region46: #{tpu_custom_call.1} parent=1 // pred_check
      _
    $region47: #{tpu_custom_call.1} parent=1 // pred_check_branch
      %64 = sbr.rel (0) target = $region49
    $region48: #{tpu_custom_call.1} parent=1 // pred_region
      %66 = dma.done [#allocation4], 512
    $region49: #{tpu_custom_call.1} parent=1 // pred_fallthru
      _
    // Predicated region
    $region50: #{tpu_custom_call.1} parent=1 // pred_check
      _
    $region51: #{tpu_custom_call.1} parent=1 // pred_check_branch
      %68 = sbr.rel (0) target = $region53
    $region52: #{tpu_custom_call.1} parent=1 // pred_region
      %70 = dma.done [#allocation6], 1536
    $region53: #{tpu_custom_call.1} parent=1 // pred_fallthru
      _
    %v71 = vld [vmem:[%s0] sm:$0xff]
    %v72 = vld [vmem:[%s0 + $0x8] sm:$0x3f]
    %v73 = vld [vmem:[%s2] sm:$0xff]
    %v74 = vld [vmem:[%s2 + $0x8] sm:$0xff]
    %v75 = vld [vmem:[%s2 + $0x10] sm:$0xff]
    %v76 = vld [vmem:[%s2 + $0x18] sm:$0xff]
    %v77 = vld [vmem:[%s3] sm:$0x1]
    %v79 = vperm.slane %v77, 0
    %vm81 = vcmask 261120
    %v83 = vsel %vm81, %v71, 0
    %v86 = vsel %vm81, %v72, 0
    %88 = vmatpush.msra.mxu0 0.0
    %89 = vmatpush.msra.mxu0 0.0
    %90 = vmatpush.msra.mxu0 0.0
    %91 = vmatpush.msra.mxu0 0.0
    %92 = vmatpush.msra.mxu0 0.0
    %93 = vmatpush.msra.mxu0 0.0
    %94 = vmatpush.msra.mxu0 0.0
    %95 = vmatpush.msra.mxu0 0.0
    %96 = vmatpush.msra.mxu0 0.0
    %97 = vmatpush.msra.mxu0 0.0
    %98 = vmatpush.msra.mxu0 0.0
    %99 = vmatpush.msra.mxu0 0.0
    %100 = vmatpush.msra.mxu0 %v76
    %101 = vmatpush.msra.mxu0 %v75
    %102 = vmatpush.msra.mxu0 %v74
    %103 = vmatpush.msra.mxu0 %v73
    %104 = vmatmul.f32.gmra.mxu0 %v83
    %v105 = vpop.f32.mrf.mxu0
    %v106 = vadd.f32 %v79, %v105
    %107 = vmatmul.f32.gmra.mxu0 %v86
    %v108 = vpop.f32.mrf.mxu0
    %v109 = vadd.f32 %v79, %v108
    %110 = vdwg.mxu0
    %v111 = vmax.f32 %v106, 0.0
    %v112 = vmax.f32 %v109, 0.0
    %v113 = vld [vmem:[#allocation3] sm:$0xff]
    %v114 = vld [vmem:[#allocation3 + $0x8] sm:$0xff]
    %v115 = vld [vmem:[#allocation3 + $0x10] sm:$0xff]
    %v116 = vld [vmem:[#allocation3 + $0x18] sm:$0xff]
    %v117 = vld [vmem:[%s5] sm:$0x1]
    %v119 = vperm.slane %v117, 0
    %v122 = vsel %vm81, %v111, 0
    %v125 = vsel %vm81, %v112, 0
    %127 = vmatpush.msra.mxu0 0.0
    %128 = vmatpush.msra.mxu0 0.0
    %129 = vmatpush.msra.mxu0 0.0
    %130 = vmatpush.msra.mxu0 0.0
    %131 = vmatpush.msra.mxu0 0.0
    %132 = vmatpush.msra.mxu0 0.0
    %133 = vmatpush.msra.mxu0 0.0
    %134 = vmatpush.msra.mxu0 0.0
    %135 = vmatpush.msra.mxu0 0.0
    %136 = vmatpush.msra.mxu0 0.0
    %137 = vmatpush.msra.mxu0 0.0
    %138 = vmatpush.msra.mxu0 0.0
    %139 = vmatpush.msra.mxu0 %v116
    %140 = vmatpush.msra.mxu0 %v115
    %141 = vmatpush.msra.mxu0 %v114
    %142 = vmatpush.msra.mxu0 %v113
    %143 = vmatmul.f32.gmra.mxu0 %v122
    %v144 = vpop.f32.mrf.mxu0
    %v145 = vadd.f32 %v119, %v144
    %146 = vmatmul.f32.gmra.mxu0 %v125
    %v147 = vpop.f32.mrf.mxu0
    %v148 = vadd.f32 %v119, %v147
    %149 = vdwg.mxu0
    %v150 = vmax.f32 %v145, 0.0
    %v151 = vmax.f32 %v148, 0.0
    %v152 = vlaneseq
    %v153 = vshrl.u32 %v152, 7
    %v154 = vadd.s32 %v153, 8
    %v155 = vlaneseq
    %v156 = vand.u32 %v155, 127
    %v157 = vsub.s32 %v153, %v156
    %v158 = vsub.s32 %v154, %v156
    %vm159 = vcmp.eq.s32.totalorder %v157, 0
    %vm160 = vcmp.eq.s32.totalorder %v158, 0
    %v161 = vsel %vm159, 1.0, 0.0
    %v162 = vsel %vm160, 1.0, 0.0
    %v163 = vld [vmem:[#allocation5] sm:$0xff]
    %v164 = vld [vmem:[#allocation5 + $0x8] sm:$0xff]
    %v165 = vld [vmem:[#allocation5 + $0x10] sm:$0xff]
    %v166 = vld [vmem:[#allocation5 + $0x18] sm:$0xff]
    %v168 = vsel %vm81, %v150, 0
    %v171 = vsel %vm81, %v151, 0
    %173 = vmatpush.msra.mxu0 0.0
    %174 = vmatpush.msra.mxu0 0.0
    %175 = vmatpush.msra.mxu0 0.0
    %176 = vmatpush.msra.mxu0 0.0
    %177 = vmatpush.msra.mxu0 0.0
    %178 = vmatpush.msra.mxu0 0.0
    %179 = vmatpush.msra.mxu0 0.0
    %180 = vmatpush.msra.mxu0 0.0
    %181 = vmatpush.msra.mxu0 0.0
    %182 = vmatpush.msra.mxu0 0.0
    %183 = vmatpush.msra.mxu0 0.0
    %184 = vmatpush.msra.mxu0 0.0
    %185 = vmatpush.msra.mxu0 %v166
    %186 = vmatpush.msra.mxu0 %v165
    %187 = vmatpush.msra.mxu0 %v164
    %188 = vmatpush.msra.mxu0 %v163
    %189 = vmatmul.f32.gmra.mxu0 %v168
    %v190 = vpop.f32.mrf.mxu0
    %v191 = vadd.f32 0.0, %v190
    %192 = vmatmul.f32.gmra.mxu0 %v171
    %v193 = vpop.f32.mrf.mxu0
    %v194 = vadd.f32 0.0, %v193
    %195 = vdwg.mxu0
    %vm196 = vcmp.eq.s32.totalorder %v157, 1
    %vm197 = vcmp.eq.s32.totalorder %v158, 1
    %v198 = vsel %vm196, 1.0, 0.0
    %v199 = vsel %vm197, 1.0, 0.0
    %s200 = scalar_lea.vmem [#allocation5], 32
    %v201 = vld [vmem:[%s200] sm:$0xff]
    %v202 = vld [vmem:[%s200 + $0x8] sm:$0xff]
    %v203 = vld [vmem:[%s200 + $0x10] sm:$0xff]
    %v204 = vld [vmem:[%s200 + $0x18] sm:$0xff]
    %205 = vmatpush.msra.mxu0 0.0
    %206 = vmatpush.msra.mxu0 0.0
    %207 = vmatpush.msra.mxu0 0.0
    %208 = vmatpush.msra.mxu0 0.0
    %209 = vmatpush.msra.mxu0 0.0
    %210 = vmatpush.msra.mxu0 0.0
    %211 = vmatpush.msra.mxu0 0.0
    %212 = vmatpush.msra.mxu0 0.0
    %213 = vmatpush.msra.mxu0 0.0
    %214 = vmatpush.msra.mxu0 0.0
    %215 = vmatpush.msra.mxu0 0.0
    %216 = vmatpush.msra.mxu0 0.0
    %217 = vmatpush.msra.mxu0 %v204
    %218 = vmatpush.msra.mxu0 %v203
    %219 = vmatpush.msra.mxu0 %v202
    %220 = vmatpush.msra.mxu0 %v201
    %221 = vmatmul.f32.gmra.mxu0 %v168
    %v222 = vpop.f32.mrf.mxu0
    %v223 = vadd.f32 0.0, %v222
    %224 = vmatmul.f32.gmra.mxu0 %v171
    %v225 = vpop.f32.mrf.mxu0
    %v226 = vadd.f32 0.0, %v225
    %227 = vdwg.mxu0
    %vm228 = vcmask 113664
    %v230 = vsel %vm228, %v198, 0
    %v233 = vsel %vm228, %v199, 0
    %vm235 = vcmask 1045504
    %v237 = vsel %vm235, %v226, 0
    %239 = vmatpush.msra.mxu0 0.0
    %240 = vmatpush.msra.mxu0 0.0
    %241 = vmatpush.msra.mxu0 0.0
    %242 = vmatpush.msra.mxu0 0.0
    %243 = vmatpush.msra.mxu0 0.0
    %244 = vmatpush.msra.mxu0 0.0
    %245 = vmatpush.msra.mxu0 0.0
    %246 = vmatpush.msra.mxu0 0.0
    %247 = vmatpush.msra.mxu0 0.0
    %248 = vmatpush.msra.mxu0 0.0
    %249 = vmatpush.msra.mxu0 0.0
    %250 = vmatpush.msra.mxu0 0.0
    %251 = vmatpush.msra.mxu0 0.0
    %252 = vmatpush.msra.mxu0 0.0
    %253 = vmatpush.msra.mxu0 %v237
    %254 = vmatpush.msra.mxu0 %v223
    %255 = vmatmul.f32.gmra.mxu0 %v230
    %v256 = vpop.f32.mrf.mxu0
    %v257 = vadd.f32 0.0, %v256
    %258 = vmatmul.f32.gmra.mxu0 %v233
    %v259 = vpop.f32.mrf.mxu0
    %v260 = vadd.f32 0.0, %v259
    %261 = vdwg.mxu0
    %v263 = vsel %vm228, %v161, 0
    %v266 = vsel %vm228, %v162, 0
    %v269 = vsel %vm235, %v194, 0
    %271 = vmatpush.msra.mxu0 0.0
    %272 = vmatpush.msra.mxu0 0.0
    %273 = vmatpush.msra.mxu0 0.0
    %274 = vmatpush.msra.mxu0 0.0
    %275 = vmatpush.msra.mxu0 0.0
    %276 = vmatpush.msra.mxu0 0.0
    %277 = vmatpush.msra.mxu0 0.0
    %278 = vmatpush.msra.mxu0 0.0
    %279 = vmatpush.msra.mxu0 0.0
    %280 = vmatpush.msra.mxu0 0.0
    %281 = vmatpush.msra.mxu0 0.0
    %282 = vmatpush.msra.mxu0 0.0
    %283 = vmatpush.msra.mxu0 0.0
    %284 = vmatpush.msra.mxu0 0.0
    %285 = vmatpush.msra.mxu0 %v269
    %286 = vmatpush.msra.mxu0 %v191
    %287 = vmatmul.f32.gmra.mxu0 %v263
    %v288 = vpop.f32.mrf.mxu0
    %v289 = vadd.f32 %v257, %v288
    %290 = vmatmul.f32.gmra.mxu0 %v266
    %v291 = vpop.f32.mrf.mxu0
    %v292 = vadd.f32 %v260, %v291
    %293 = vdwg.mxu0
    %vm294 = vcmp.eq.s32.totalorder %v157, 2
    %vm295 = vcmp.eq.s32.totalorder %v158, 2
    %v296 = vsel %vm294, 1.0, 0.0
    %v297 = vsel %vm295, 1.0, 0.0
    %s298 = scalar_lea.vmem [#allocation5], 64
    %v299 = vld [vmem:[%s298] sm:$0xff]
    %v300 = vld [vmem:[%s298 + $0x8] sm:$0xff]
    %v301 = vld [vmem:[%s298 + $0x10] sm:$0xff]
    %v302 = vld [vmem:[%s298 + $0x18] sm:$0xff]
    %303 = vmatpush.msra.mxu0 0.0
    %304 = vmatpush.msra.mxu0 0.0
    %305 = vmatpush.msra.mxu0 0.0
    %306 = vmatpush.msra.mxu0 0.0
    %307 = vmatpush.msra.mxu0 0.0
    %308 = vmatpush.msra.mxu0 0.0
    %309 = vmatpush.msra.mxu0 0.0
    %310 = vmatpush.msra.mxu0 0.0
    %311 = vmatpush.msra.mxu0 0.0
    %312 = vmatpush.msra.mxu0 0.0
    %313 = vmatpush.msra.mxu0 0.0
    %314 = vmatpush.msra.mxu0 0.0
    %315 = vmatpush.msra.mxu0 %v302
    %316 = vmatpush.msra.mxu0 %v301
    %317 = vmatpush.msra.mxu0 %v300
    %318 = vmatpush.msra.mxu0 %v299
    %319 = vmatmul.f32.gmra.mxu0 %v168
    %v320 = vpop.f32.mrf.mxu0
    %v321 = vadd.f32 0.0, %v320
    %322 = vmatmul.f32.gmra.mxu0 %v171
    %v323 = vpop.f32.mrf.mxu0
    %v324 = vadd.f32 0.0, %v323
    %325 = vdwg.mxu0
    %v327 = vsel %vm228, %v296, 0
    %v330 = vsel %vm228, %v297, 0
    %v333 = vsel %vm235, %v324, 0
    %335 = vmatpush.msra.mxu0 0.0
    %336 = vmatpush.msra.mxu0 0.0
    %337 = vmatpush.msra.mxu0 0.0
    %338 = vmatpush.msra.mxu0 0.0
    %339 = vmatpush.msra.mxu0 0.0
    %340 = vmatpush.msra.mxu0 0.0
    %341 = vmatpush.msra.mxu0 0.0
    %342 = vmatpush.msra.mxu0 0.0
    %343 = vmatpush.msra.mxu0 0.0
    %344 = vmatpush.msra.mxu0 0.0
    %345 = vmatpush.msra.mxu0 0.0
    %346 = vmatpush.msra.mxu0 0.0
    %347 = vmatpush.msra.mxu0 0.0
    %348 = vmatpush.msra.mxu0 0.0
    %349 = vmatpush.msra.mxu0 %v333
    %350 = vmatpush.msra.mxu0 %v321
    %351 = vmatmul.f32.gmra.mxu0 %v327
    %v352 = vpop.f32.mrf.mxu0
    %v353 = vadd.f32 0.0, %v352
    %354 = vmatmul.f32.gmra.mxu0 %v330
    %v355 = vpop.f32.mrf.mxu0
    %v356 = vadd.f32 0.0, %v355
    %357 = vdwg.mxu0
    %v358 = vadd.f32 %v289, %v353
    %v359 = vadd.f32 %v292, %v356
    %v360 = vld [vmem:[%s7] sm:$0x1]
    %v362 = vperm.slane %v360, 0
    %v364 = vadd.f32 %v358, %v362
    %v365 = vadd.f32 %v359, %v362
    %v366 = vmax.f32 %v364, 0.0
    %v367 = vmax.f32 %v365, 0.0
    %v368 = vld [vmem:[%s8] sm:$0xff]
    %v369 = vld [vmem:[%s8 + $0x8] sm:$0xff]
    %v370 = vld [vmem:[%s8 + $0x10] sm:$0xff]
    %v371 = vld [vmem:[%s8 + $0x18] sm:$0xff]
    %v372 = vld [vmem:[%s9] sm:$0x1]
    %v374 = vperm.slane %v372, 0
    %v377 = vsel %vm81, %v366, 0
    %v380 = vsel %vm81, %v367, 0
    %382 = vmatpush.msra.mxu0 0.0
    %383 = vmatpush.msra.mxu0 0.0
    %384 = vmatpush.msra.mxu0 0.0
    %385 = vmatpush.msra.mxu0 0.0
    %386 = vmatpush.msra.mxu0 0.0
    %387 = vmatpush.msra.mxu0 0.0
    %388 = vmatpush.msra.mxu0 0.0
    %389 = vmatpush.msra.mxu0 0.0
    %390 = vmatpush.msra.mxu0 0.0
    %391 = vmatpush.msra.mxu0 0.0
    %392 = vmatpush.msra.mxu0 0.0
    %393 = vmatpush.msra.mxu0 0.0
    %394 = vmatpush.msra.mxu0 %v371
    %395 = vmatpush.msra.mxu0 %v370
    %396 = vmatpush.msra.mxu0 %v369
    %397 = vmatpush.msra.mxu0 %v368
    %398 = vmatmul.f32.gmra.mxu0 %v377
    %v399 = vpop.f32.mrf.mxu0
    %v400 = vadd.f32 %v374, %v399
    %401 = vmatmul.f32.gmra.mxu0 %v380
    %v402 = vpop.f32.mrf.mxu0
    %v403 = vadd.f32 %v374, %v402
    %404 = vdwg.mxu0
    %v405 = vsub.f32 0.0, %v400
    %v406 = vsub.f32 0.0, %v403
    %v407 = vmul.f32 %v405, 1.442695
    %v408 = vpow.pop %v407
    %v409 = vmul.f32 %v406, 1.442695
    %v410 = vpow.pop %v409
    %v411 = vadd.f32 %v408, 1.0
    %v412 = vadd.f32 %v410, 1.0
    %v413 = vrcp.pop %v411
    %v414 = vmul.f32 %v411, %v413
    %v415 = vsub.f32 1.0, %v414
    %v416 = vmul.f32 %v413, %v415
    %v417 = vadd.f32 %v413, %v416
    %vm418 = vweird.f32 %v411
    %vm419 = vweird.f32 %v413
    %vm420 = vmor %vm418, %vm419
    %v421 = vsel %vm420, %v413, %v417
    %v422 = vand.u32 2147483647, %v411
    %vm423 = vcmp.eq.f32.partialorder %v422, 8.507059e+37
    %v424 = vand.u32 %v411, 2147483648
    %v425 = vor.u32 1.1754944e-38, %v424
    %v426 = vsel %vm423, %v425, %v421
    %v427 = vmul.f32 1.0, %v426
    %v428 = vrcp.pop %v412
    %v429 = vmul.f32 %v412, %v428
    %v430 = vsub.f32 1.0, %v429
    %v431 = vmul.f32 %v428, %v430
    %v432 = vadd.f32 %v428, %v431
    %vm433 = vweird.f32 %v412
    %vm434 = vweird.f32 %v428
    %vm435 = vmor %vm433, %vm434
    %v436 = vsel %vm435, %v428, %v432
    %v437 = vand.u32 2147483647, %v412
    %vm438 = vcmp.eq.f32.partialorder %v437, 8.507059e+37
    %v439 = vand.u32 %v412, 2147483648
    %v440 = vor.u32 1.1754944e-38, %v439
    %v441 = vsel %vm438, %v440, %v436
    %v442 = vmul.f32 1.0, %v441
    %v443 = vld [vmem:[%s1] sm:$0xff]
    %v444 = vld [vmem:[%s1 + $0x8] sm:$0x1f]
    %447 = vrot.lane.b32.xlu0 %v427, 126
    %v448 = vpop.permute.xlu0 %447
    %449 = vrot.lane.b32.xlu0 %v442, 126
    %v450 = vpop.permute.xlu0 %449
    %v453 = vmul.f32 %v443, %v448
    %v454 = vmul.f32 %v444, %v450
    %vm455 = vcmask 1044480
    %v456 = vrot.slane %v427, 3
    %v457 = vrot.slane %v442, 3
    %v458 = vsel %vm455, %v456, %v457
    %v461 = vmul.f32 %v443, %v458
    %v462 = vmul.f32 %v444, %v457
    %vm465 = vcmask 1040384
    %v466 = vrot.slane %v461, 7
    %v467 = vrot.slane %v462, 7
    %v468 = vsel %vm465, %v466, %v467
    %v471 = vadd.f32 %v453, %v466
    %v472 = vadd.f32 %v454, %v468
    %vm473 = vcmask 1043456
    %v474 = vrot.slane %v427, 4
    %v475 = vrot.slane %v442, 4
    %v476 = vsel %vm473, %v474, %v475
    %477 = vrot.lane.b32.xlu0 %v476, 2
    %v478 = vpop.permute.xlu0 %477
    %479 = vrot.lane.b32.xlu0 %v475, 2
    %v480 = vpop.permute.xlu0 %479
    %v483 = vadd.f32 %v427, %v478
    %v484 = vadd.f32 %v442, %v480
    %v485 = vrcp.pop %v483
    %v486 = vrcp.pop %v484
    %v487 = vmul.f32 %v483, %v485
    %v488 = vmul.f32 %v484, %v486
    %v489 = vsub.f32 2.0, %v487
    %v490 = vsub.f32 2.0, %v488
    %v491 = vmul.f32 %v485, %v489
    %v492 = vmul.f32 %v486, %v490
    %s493 = sld [smem:[#allocation2]]
    %v494 = vstv %s493
    %v495 = vmul.f32 %v494, %v471
    %v496 = vmul.f32 %v494, %v472
    %v499 = vrot.slane %v491, 7
    %v500 = vrot.slane %v492, 7
    %v501 = vsel %vm465, %v499, %v500
    %502 = vrot.lane.b32.xlu0 %v499, 126
    %v503 = vpop.permute.xlu0 %502
    %504 = vrot.lane.b32.xlu0 %v501, 126
    %v505 = vpop.permute.xlu0 %504
    %v508 = vmul.f32 %v495, %v503
    %v509 = vmul.f32 %v496, %v505
    %v510 = vlog2.pop %v508
    %v511 = vmul.f32 %v510, 0.6931472
    %v512 = vlog2.pop %v509
    %v513 = vmul.f32 %v512, 0.6931472
    %vm516 = vcmask 1046528
    %v517 = vrot.slane %v511, 1
    %v518 = vrot.slane %v513, 1
    %v519 = vsel %vm516, %v517, %v518
    %vm522 = vcmask 15360
    %v523 = vsel %vm522, %v519, 0.0
    %vm524 = vcmask 11264
    %v525 = vsel %vm524, %v518, 0.0
    %v526 = vadd.f32 %v523, %v525
    %527 = vadd.xlane.f32.xlu0 %v526
    %v528 = vpop.xlane.xlu0 %527
    %v529 = vrot.slane %v528, 4
    %v530 = vadd.f32 %v528, %v529
    %v531 = vrot.slane %v530, 2
    %v532 = vadd.f32 %v530, %v531
    %v533 = vrot.slane %v532, 1
    %v534 = vadd.f32 %v532, %v533
    %s535 = vtos %v534
    %v536 = vrcp.pop 24.0
    %v537 = vmul.f32 24.0, %v536
    %v538 = vsub.f32 1.0, %v537
    %v539 = vmul.f32 %v536, %v538
    %v540 = vadd.f32 %v536, %v539
    %vm541 = vweird.f32 %v536
    %v542 = vsel %vm541, %v536, %v540
    %s543 = vtos %v542
    %s544 = smul.f32 %s535, %s543
    %v545 = vstv %s544
    %v546 = vsub.f32 %v511, %v545
    %v547 = vsub.f32 %v513, %v545
    %vm548 = vcmask 15361
    %549 = vst.msk [vmem:[%s11 - $0x1] sm:$0xfe] %vm548, %v546
    %vm550 = vcmask 12288
    %551 = vst.msk [vmem:[%s11 + $0x7] sm:$0x1f] %vm550, %v547
    // Predicated region
    $region54: #{tpu_custom_call.1} parent=1 // pred_check
      _
    $region55: #{tpu_custom_call.1} parent=1 // pred_check_branch
      %553 = sbr.rel (0) target = $region57
    $region56: #{tpu_custom_call.1} parent=1 // pred_region
      _
    $region57: #{tpu_custom_call.1} parent=1 // pred_fallthru
      _
    // Predicated region
    $region58: #{tpu_custom_call.1} parent=1 // pred_check
      _
    $region59: #{tpu_custom_call.1} parent=1 // pred_check_branch
      %555 = sbr.rel (0) target = $region61
    $region60: #{tpu_custom_call.1} parent=1 // pred_region
      _
    $region61: #{tpu_custom_call.1} parent=1 // pred_fallthru
      _
    %556 = vsyncpa [#allocation4], 1
    %557 = vsyncpa [#allocation6], 1

</llo_original>
